<compile_context>
chip_gen: v6e
topology: v6e:2x2x1
jax: 0.10.0
libtpu: 0.0.40
codegen_flags: <defaults>
</compile_context>

<pallas_src>
import math
import functools

import jax
import jax.numpy as jnp
from jax.experimental import pallas as pl
from jax.experimental.pallas import tpu as pltpu


# ----------------------------------------------------------------------------
# Small helpers
# ----------------------------------------------------------------------------

def _cdiv(a, b):
    return -(-a // b)


def _round_up(a, m):
    return _cdiv(a, m) * m


# ----------------------------------------------------------------------------
# Kernel A: conv1 as im2col matmul + bias + ReLU (row-tiled grid)
# ----------------------------------------------------------------------------

def _matmul_bias_relu_kernel(x_ref, w_ref, b_ref, o_ref):
    y = jnp.dot(x_ref[...], w_ref[...], preferred_element_type=jnp.float32)
    o_ref[...] = jnp.maximum(y + b_ref[...], 0.0)


def matmul_bias_relu(x, w, b, *, tile_bytes=4 << 20):
    """Row-tiled matmul + bias + ReLU.  Single row tile at small size (latency-bound path
    on single-TC chips), balanced 8-aligned tiles otherwise.  Weights stay VMEM-resident
    via a constant index_map."""
    n, k = x.shape
    mo = w.shape[1]
    n8 = _round_up(n, 8)
    if n8 * k * 4 <= tile_bytes:
        tm, n_pad = n8, n8                      # one grid step: no per-step overhead
    else:
        g = max(2, _cdiv(n8 * k * 4, tile_bytes))
        tm = _round_up(_cdiv(n8, g), 8)
        n_pad = _round_up(n8, tm)
    if n_pad != n:
        x = jnp.pad(x, ((0, n_pad - n), (0, 0)))
    grid = (n_pad // tm,)

    flops = 2 * n_pad * k * mo
    bytes_accessed = 4 * (n_pad * k + k * mo + mo + n_pad * mo)

    # TODO(synk): on v7x, switch this grid axis to pltpu.CORE_PARALLEL to shard row tiles
    # across both TensorCores; "parallel" is kept because it is safe on every generation.
    y = pl.pallas_call(
        _matmul_bias_relu_kernel,
        out_shape=jax.ShapeDtypeStruct((n_pad, mo), jnp.float32),
        grid=grid,
        in_specs=[
            pl.BlockSpec((tm, k), lambda i: (i, 0)),    # streaming row tile
            pl.BlockSpec((k, mo), lambda i: (0, 0)),    # weights: resident
            pl.BlockSpec((1, mo), lambda i: (0, 0)),    # bias
        ],
        out_specs=pl.BlockSpec((tm, mo), lambda i: (i, 0)),
        compiler_params=pltpu.CompilerParams(dimension_semantics=("parallel",)),
        cost_estimate=pl.CostEstimate(flops=flops, transcendentals=0,
                                      bytes_accessed=bytes_accessed),
    )(x, w, b)
    return y if n_pad == n else y[:n]


# ----------------------------------------------------------------------------
# Kernel B: fused conv2 -> conv3 -> L2-norm -> attention -> dueling head -> softmax
# ----------------------------------------------------------------------------
#
# Input rows (conv2 im2col patches) for a batch tile of bt samples are ordered
#   row = (i*9 + j) * bt + b_in_tile,   (i, j) = conv2 output position on the 9x9 grid.
# With this order:
#   * conv3 tap (di, dj) is a pure row shift by (di*9 + dj)*bt of the conv2 output,
#     so conv3 is 9 shifted (81*bt, 64) @ (64, 64) matmuls (valid 7x7 rows read out later).
#   * the head's flatten contraction uses contiguous (bt, 64) row blocks per spatial
#     position: h += dot(ya[(oi*9+oj)*bt : +bt, :], wh[s*64:(s+1)*64, :]).

def _fused_tail_kernel(p2_ref, w2_ref, b2_ref, w3_ref, b3_ref,
                       wa1_ref, ba1_ref, wa2_ref, ba2_ref,
                       wh_ref, bh_ref, wz_ref, bz_ref,
                       q_ref, y2_s, ya_s, *, bt, action_space, atoms):
    nr = 81 * bt          # rows of the full 9x9 conv2 grid for this batch tile
    pad = 20 * bt         # max conv3 row shift = (2*9 + 2)*bt

    # ---- conv2 (matmul on pre-built patches) + ReLU -> scratch (shift-padded with 0) ----
    y2 = jnp.dot(p2_ref[...], w2_ref[...], preferred_element_type=jnp.float32) + b2_ref[...]
    y2_s[0:nr, :] = jnp.maximum(y2, 0.0)
    y2_s[nr:nr + pad, :] = jnp.zeros((pad, 64), jnp.float32)

    # ---- conv3 as 9 shifted matmuls over the full 9x9 grid ----
    acc = None
    for di in range(3):
        for dj in range(3):
            off = (di * 9 + dj) * bt
            t = di * 3 + dj
            part = jnp.dot(y2_s[off:off + nr, :], w3_ref[t * 64:(t + 1) * 64, :],
                           preferred_element_type=jnp.float32)
            acc = part if acc is None else acc + part
    y3 = jnp.maximum(acc + b3_ref[...], 0.0)                       # (nr, 64)

    # ---- F.normalize(p=2, dim=channel): x / max(||x||, 1e-12) ----
    ss = jnp.sum(y3 * y3, axis=-1, keepdims=True)
    y3 = y3 * jax.lax.rsqrt(jnp.maximum(ss, 1e-24))

    # ---- attention: 1x1 conv 64->512 + ELU, 1x1 conv 512->2 + sigmoid, x*(w0+w1) ----
    h = jnp.dot(y3, wa1_ref[...], preferred_element_type=jnp.float32) + ba1_ref[...]
    h = jnp.where(h > 0.0, h, jnp.exp(jnp.minimum(h, 0.0)) - 1.0)  # ELU(alpha=1)
    w = jax.nn.sigmoid(jnp.dot(h, wa2_ref[...], preferred_element_type=jnp.float32)
                       + ba2_ref[...])                              # (nr, 2)
    ya_s[...] = y3 * (w[:, 0:1] + w[:, 1:2])                        # (nr, 64)

    # ---- dueling noisy head: in-kernel flatten contraction over the valid 7x7 grid ----
    # wh = [whv | wha] (3136, 2H); wz = blockdiag(wzv, wza) (2H, atoms + A*atoms).
    hsum = None
    for s in range(49):
        oi, oj = s // 7, s % 7
        r0 = (oi * 9 + oj) * bt
        part = jnp.dot(ya_s[r0:r0 + bt, :], wh_ref[s * 64:(s + 1) * 64, :],
                       preferred_element_type=jnp.float32)
        hsum = part if hsum is None else hsum + part
    hf = jnp.maximum(hsum + bh_ref[...], 0.0)                       # (bt, 2H)
    va = jnp.dot(hf, wz_ref[...], preferred_element_type=jnp.float32) + bz_ref[...]

    v = va[:, :atoms]                                               # (bt, atoms)
    parts = [va[:, atoms + i * atoms: atoms + (i + 1) * atoms] for i in range(action_space)]
    a_mean = parts[0]
    for p_ in parts[1:]:
        a_mean = a_mean + p_
    base = v - a_mean * (1.0 / float(action_space))

    outs = []
    for i in range(action_space):
        qi = base + parts[i]
        qi = qi - jnp.max(qi, axis=-1, keepdims=True)
        ei = jnp.exp(qi)
        # exact division (approx reciprocal previously broke the sum-to-1 property)
        outs.append(ei / jnp.sum(ei, axis=-1, keepdims=True))
    q_ref[...] = jnp.concatenate(outs, axis=-1)                     # (bt, A*atoms)


def fused_tail(p2, nb, bt, weights, *, action_space, atoms, hidden):
    (w2, b2, w3, b3, wa1, ba1, wa2, ba2, wh, bh, wz, bz) = weights
    nq = action_space * atoms
    rows = 81 * bt
    r_tot = nb * rows

    kern = functools.partial(_fused_tail_kernel, bt=bt,
                             action_space=action_space, atoms=atoms)

    flops = (2 * r_tot * (512 * 64 + 9 * 64 * 64 + 64 * 512 + 512 * 2)
             + 2 * nb * bt * (3136 * 2 * hidden + 2 * hidden * (atoms + nq)))
    transcendentals = r_tot * (512 + 2) + nb * bt * nq
    bytes_accessed = 4 * (r_tot * 512 + 512 * 64 + 64 + 576 * 64 + 64
                          + 64 * 512 + 512 + 512 * 2 + 2
                          + 3136 * 2 * hidden + 2 * hidden
                          + 2 * hidden * (atoms + nq) + (atoms + nq)
                          + nb * bt * nq)

    const = lambda i: (0, 0)
    q = pl.pallas_call(
        kern,
        out_shape=jax.ShapeDtypeStruct((nb * bt, nq), jnp.float32),
        grid=(nb,),
        in_specs=[
            pl.BlockSpec((rows, 512), lambda i: (i, 0)),  # conv2 patches (batch tile)
            pl.BlockSpec(w2.shape, const), pl.BlockSpec(b2.shape, const),
            pl.BlockSpec(w3.shape, const), pl.BlockSpec(b3.shape, const),
            pl.BlockSpec(wa1.shape, const), pl.BlockSpec(ba1.shape, const),
            pl.BlockSpec(wa2.shape, const), pl.BlockSpec(ba2.shape, const),
            pl.BlockSpec(wh.shape, const), pl.BlockSpec(bh.shape, const),
            pl.BlockSpec(wz.shape, const), pl.BlockSpec(bz.shape, const),
        ],
        out_specs=pl.BlockSpec((bt, nq), lambda i: (i, 0)),
        scratch_shapes=[pltpu.VMEM((101 * bt, 64), jnp.float32),   # conv2 out + shift pad
                        pltpu.VMEM((81 * bt, 64), jnp.float32)],   # attention output
        compiler_params=pltpu.CompilerParams(dimension_semantics=("parallel",)),
        cost_estimate=pl.CostEstimate(flops=flops, transcendentals=transcendentals,
                                      bytes_accessed=bytes_accessed),
    )(p2, w2, b2, w3, b3, wa1, ba1, wa2, ba2, wh, bh, wz, bz)
    return q


# ----------------------------------------------------------------------------
# Glue: im2col over NHWC activations (padding / strided slicing only, stays in XLA)
# ----------------------------------------------------------------------------

def im2col_nhwc(x, kh, kw, stride, pad):
    """x: (B, H, W, C) -> patches (B, Ho, Wo, kh*kw*C); column = (di*kw+dj)*C + c."""
    b, h, w, c = x.shape
    if pad:
        x = jnp.pad(x, ((0, 0), (pad, pad), (pad, pad), (0, 0)))
    hp, wp = h + 2 * pad, w + 2 * pad
    ho = (hp - kh) // stride + 1
    wo = (wp - kw) // stride + 1
    cols = []
    for di in range(kh):
        for dj in range(kw):
            cols.append(x[:, di:di + stride * ho:stride, dj:dj + stride * wo:stride, :])
    patches = jnp.stack(cols, axis=3)                       # (B, Ho, Wo, kh*kw, C)
    return patches.reshape(b, ho, wo, kh * kw * c), ho, wo


def _pick_batch_tile(b):
    """Batch tiling for the fused kernel: one grid step while the per-step input block is
    small; 8-sample tiles otherwise (keeps blocks 8-aligned and VMEM bounded on all gens)."""
    if b * 81 * 512 * 4 <= (4 << 20):
        return b, 1
    bt = 8
    return bt, _cdiv(b, bt)


# ----------------------------------------------------------------------------
# Parameter construction (PyTorch init semantics; layouts permuted once, at init)
# ----------------------------------------------------------------------------

def _uniform(key, shape, bound):
    return jax.random.uniform(key, shape, jnp.float32, minval=-bound, maxval=bound)


def _conv_params(key, cout, cin, kh, kw):
    k1, k2 = jax.random.split(key)
    fan_in = cin * kh * kw
    bound = 1.0 / math.sqrt(fan_in)
    w = _uniform(k1, (cout, cin, kh, kw), bound)            # PyTorch OIHW layout
    b = _uniform(k2, (cout,), bound)
    return w, b


def _conv_to_nhwc_matmul(w):
    """(Cout, Cin, kh, kw) -> (kh*kw*Cin, Cout): rows match the NHWC im2col patch columns."""
    cout, cin, kh, kw = w.shape
    return jnp.transpose(w, (2, 3, 1, 0)).reshape(kh * kw * cin, cout)


def _noisy_linear_params(key, in_f, out_f, std_init):
    """Effective (training=True) torch-layout weights: (out,in), (out,)."""
    k1, k2, k3, k4 = jax.random.split(key, 4)
    mu_range = 1.0 / math.sqrt(in_f)
    w_mu = _uniform(k1, (out_f, in_f), mu_range)
    b_mu = _uniform(k2, (out_f,), mu_range)
    w_sigma = jnp.full((out_f, in_f), std_init / math.sqrt(in_f), jnp.float32)
    b_sigma = jnp.full((out_f,), std_init / math.sqrt(out_f), jnp.float32)

    def scale_noise(k, n):
        z = jax.random.normal(k, (n,), jnp.float32)
        return jnp.sign(z) * jnp.sqrt(jnp.abs(z))

    eps_in = scale_noise(k3, in_f)
    eps_out = scale_noise(k4, out_f)
    w = w_mu + w_sigma * jnp.outer(eps_out, eps_in)
    b = b_mu + b_sigma * eps_out
    return w, b


def init_params(key, history_length, hidden, atoms, action_space, noisy_std):
    ks = jax.random.split(key, 9)
    w1, b1 = _conv_params(ks[0], 32, history_length, 8, 8)
    w2, b2 = _conv_params(ks[1], 64, 32, 4, 4)
    w3, b3 = _conv_params(ks[2], 64, 64, 3, 3)
    wa1, ba1 = _conv_params(ks[3], 512, 64, 1, 1)
    wa2, ba2 = _conv_params(ks[4], 2, 512, 1, 1)
    whv, bhv = _noisy_linear_params(ks[5], 3136, hidden, noisy_std)
    wha, bha = _noisy_linear_params(ks[6], 3136, hidden, noisy_std)
    wzv, bzv = _noisy_linear_params(ks[7], hidden, atoms, noisy_std)
    wza, bza = _noisy_linear_params(ks[8], hidden, action_space * atoms, noisy_std)

    p = {}
    # conv weights in NHWC-im2col matmul layout
    p['w1'], p['b1'] = _conv_to_nhwc_matmul(w1), b1.reshape(1, -1)
    p['w2'], p['b2'] = _conv_to_nhwc_matmul(w2), b2.reshape(1, -1)
    p['w3'], p['b3'] = _conv_to_nhwc_matmul(w3), b3.reshape(1, -1)
    p['wa1'], p['ba1'] = _conv_to_nhwc_matmul(wa1), ba1.reshape(1, -1)
    p['wa2'], p['ba2'] = _conv_to_nhwc_matmul(wa2), ba2.reshape(1, -1)

    # Head: permute the 3136 input rows from torch NCHW-flat order (c*49 + s)
    # to NHWC-flat order (s*64 + c) so the in-kernel per-position contraction matches.
    def nhwc_rows(w_t):                           # w_t: (3136, out), rows ordered c*49+s
        out = w_t.shape[1]
        return w_t.reshape(64, 7, 7, out).transpose(1, 2, 0, 3).reshape(3136, out)

    p['wh'] = jnp.concatenate([nhwc_rows(whv.T), nhwc_rows(wha.T)], axis=1)  # (3136, 2H)
    p['bh'] = jnp.concatenate([bhv, bha]).reshape(1, -1)
    nq = atoms + action_space * atoms
    wz = jnp.zeros((2 * hidden, nq), jnp.float32)
    wz = wz.at[:hidden, :atoms].set(wzv.T)        # value block
    wz = wz.at[hidden:, atoms:].set(wza.T)        # advantage block
    p['wz'] = wz
    p['bz'] = jnp.concatenate([bzv, bza]).reshape(1, -1)

    # original (PyTorch-layout) params, used only by the independent reference
    p['ref'] = dict(w1=w1, b1=b1, w2=w2, b2=b2, w3=w3, b3=b3,
                    wa1=wa1, ba1=ba1, wa2=wa2, ba2=ba2,
                    whv=whv, bhv=bhv, wha=wha, bha=bha,
                    wzv=wzv, bzv=bzv, wza=wza, bza=bza)
    return p


# ----------------------------------------------------------------------------
# Forward pass (Pallas) and an independent pure-JAX reference (lax.conv)
# ----------------------------------------------------------------------------

def dqn_forward(x, p, *, action_space, atoms, hidden):
    b = x.shape[0]
    x = jnp.transpose(x, (0, 2, 3, 1))                            # NCHW -> NHWC, once

    # conv1: im2col stays in XLA (C=4 channel slices are too narrow for an in-kernel gather)
    p1, h1, w1o = im2col_nhwc(x, 8, 8, 4, 1)                      # (B, 20, 20, 256)
    p1 = p1.reshape(b * h1 * w1o, p1.shape[-1])
    y1 = matmul_bias_relu(p1, p['w1'], p['b1'])                   # (B*400, 32)
    y1 = y1.reshape(b, h1, w1o, 32)                               # NHWC view

    # conv2 im2col in XLA; rows reordered to (tile, i*9+j, b_in_tile) so the fused kernel
    # uses contiguous slices only (conv3 shift-matmuls + head row blocks).
    bt, nb = _pick_batch_tile(b)
    bp = bt * nb
    if bp != b:
        y1 = jnp.pad(y1, ((0, bp - b), (0, 0), (0, 0), (0, 0)))
    p2, _, _ = im2col_nhwc(y1, 4, 4, 2, 0)                        # (Bp, 9, 9, 512)
    p2 = (p2.reshape(nb, bt, 81, 512)
             .transpose(0, 2, 1, 3)
             .reshape(nb * 81 * bt, 512))

    weights = (p['w2'], p['b2'], p['w3'], p['b3'], p['wa1'], p['ba1'],
               p['wa2'], p['ba2'], p['wh'], p['bh'], p['wz'], p['bz'])
    q = fused_tail(p2, nb, bt, weights,
                   action_space=action_space, atoms=atoms, hidden=hidden)
    return q[:b].reshape(b, action_space, atoms)


def ref_forward(x, p, *, action_space, atoms):
    r = p['ref']
    hi = jax.lax.Precision.HIGHEST

    def conv(xx, w, b, stride, pad):
        y = jax.lax.conv_general_dilated(
            xx, w, window_strides=(stride, stride), padding=((pad, pad), (pad, pad)),
            dimension_numbers=('NCHW', 'OIHW', 'NCHW'), precision=hi)
        return y + b[None, :, None, None]

    y = jnp.maximum(conv(x, r['w1'], r['b1'], 4, 1), 0.0)
    y = jnp.maximum(conv(y, r['w2'], r['b2'], 2, 0), 0.0)
    y = jnp.maximum(conv(y, r['w3'], r['b3'], 1, 0), 0.0)
    nrm = jnp.sqrt(jnp.sum(y * y, axis=1, keepdims=True))
    y = y / jnp.maximum(nrm, 1e-12)

    h = conv(y, r['wa1'], r['ba1'], 1, 0)
    h = jnp.where(h > 0.0, h, jnp.exp(jnp.minimum(h, 0.0)) - 1.0)
    w = jax.nn.sigmoid(conv(h, r['wa2'], r['ba2'], 1, 0))
    y = y * w[:, :1] + y * w[:, 1:2]

    b = x.shape[0]
    feat = y.reshape(b, -1)                                        # torch NCHW flatten
    hv = jnp.maximum(jnp.dot(feat, r['whv'].T, precision=hi) + r['bhv'], 0.0)
    v = (jnp.dot(hv, r['wzv'].T, precision=hi) + r['bzv']).reshape(b, 1, atoms)
    ha = jnp.maximum(jnp.dot(feat, r['wha'].T, precision=hi) + r['bha'], 0.0)
    a = (jnp.dot(ha, r['wza'].T, precision=hi) + r['bza']).reshape(b, action_space, atoms)
    q = v + a - a.mean(axis=1, keepdims=True)
    return jax.nn.softmax(q, axis=2)


# ----------------------------------------------------------------------------

if __name__ == "__main__":
    # args: history_length=4, hidden_size=32, atoms=8, noisy_std=0.4, action_space=4
    HISTORY, HIDDEN, ATOMS, ACTIONS, NOISY_STD = 4, 32, 8, 4, 0.4
    B = 2

    key = jax.random.PRNGKey(0)
    k_param, k_x = jax.random.split(key)
    params = init_params(k_param, HISTORY, HIDDEN, ATOMS, ACTIONS, NOISY_STD)
    # 84x84 spatial is required by the module's hard-coded 3136 = 64*7*7 flatten.
    x = jax.random.uniform(k_x, (B, HISTORY, 84, 84), jnp.float32)

    q = jax.block_until_ready(
        dqn_forward(x, params, action_space=ACTIONS, atoms=ATOMS, hidden=HIDDEN))
    q_ref = jax.block_until_ready(
        ref_forward(x, params, action_space=ACTIONS, atoms=ATOMS))

    assert q.shape == (B, ACTIONS, ATOMS)
    assert bool(jnp.all(jnp.isfinite(q)))
    # softmax rows sum to 1 (exact division in-kernel)
    assert bool(jnp.allclose(jnp.sum(q, axis=2), 1.0, atol=1e-4))
    # match the independent lax.conv / jnp reference
    assert bool(jnp.allclose(q, q_ref, atol=5e-3, rtol=5e-3))

    print("KERNEL_OK")
</pallas_src>

<mosaic_0001>
module attributes {stable_mosaic.version = 11 : i64} {
  func.func @_matmul_bias_relu_kernel(%arg0: i32, %arg1: memref<800x256xf32, #tpu.memory_space<vmem>>, %arg2: memref<256x32xf32, #tpu.memory_space<vmem>>, %arg3: memref<1x32xf32, #tpu.memory_space<vmem>>, %arg4: memref<800x32xf32, #tpu.memory_space<vmem>>) attributes {dimension_semantics = [#tpu.dimension_semantics<parallel>], iteration_bounds = array<i64: 1>, scalar_prefetch = 0 : i64, scratch_operands = 0 : i64, tpu.core_type = #tpu.core_type<tc>, window_params = [{transform_indices = @transform_0, window_bounds = array<i64: 800, 256>}, {pipeline_mode = #tpu.pipeline_mode<synchronous>, transform_indices = @transform_1, window_bounds = array<i64: 256, 32>}, {pipeline_mode = #tpu.pipeline_mode<synchronous>, transform_indices = @transform_2, window_bounds = array<i64: 1, 32>}, {transform_indices = @transform_3, window_bounds = array<i64: 800, 32>}]} {
    %c0 = arith.constant 0 : index
    %c0_0 = arith.constant 0 : index
    %0 = vector.load %arg1[%c0, %c0_0] : memref<800x256xf32, #tpu.memory_space<vmem>>, vector<800x256xf32>
    %c0_1 = arith.constant 0 : index
    %c0_2 = arith.constant 0 : index
    %1 = vector.load %arg2[%c0_1, %c0_2] : memref<256x32xf32, #tpu.memory_space<vmem>>, vector<256x32xf32>
    %cst = arith.constant dense<0.000000e+00> : vector<800x32xf32>
    %2 = tpu.matmul %0, %1, %cst {dimension_numbers = #tpu.dot_dimension_numbers<[1], [0], [0], [1], [0, 0, 1, 1], [], []>} : vector<800x256xf32>, vector<256x32xf32>, vector<800x32xf32> -> vector<800x32xf32>
    %c0_3 = arith.constant 0 : index
    %c0_4 = arith.constant 0 : index
    %3 = vector.load %arg3[%c0_3, %c0_4] : memref<1x32xf32, #tpu.memory_space<vmem>>, vector<1x32xf32>
    %4 = vector.broadcast %3 : vector<1x32xf32> to vector<800x32xf32>
    %5 = arith.addf %2, %4 : vector<800x32xf32>
    %cst_5 = arith.constant 0.000000e+00 : f32
    %6 = vector.broadcast %cst_5 : f32 to vector<800x32xf32>
    %7 = arith.maximumf %5, %6 : vector<800x32xf32>
    %c0_6 = arith.constant 0 : index
    %c0_7 = arith.constant 0 : index
    %8 = vector.load %arg4[%c0_6, %c0_7] : memref<800x32xf32, #tpu.memory_space<vmem>>, vector<800x32xf32>
    tpu.vector_store %arg4[%c0_6, %c0_7], %7 {strides = array<i32>} : memref<800x32xf32, #tpu.memory_space<vmem>>, vector<800x32xf32>,
    return
  }
  func.func @transform_0(%arg0: i32) -> (i32, i32) {
    %c0_i32 = arith.constant 0 : i32
    %c0_i32_0 = arith.constant 0 : i32
    return %arg0, %c0_i32 : i32, i32
  }
  func.func @transform_1(%arg0: i32) -> (i32, i32) {
    %c0_i32 = arith.constant 0 : i32
    %c0_i32_0 = arith.constant 0 : i32
    %c0_i32_1 = arith.constant 0 : i32
    return %c0_i32, %c0_i32_0 : i32, i32
  }
  func.func @transform_2(%arg0: i32) -> (i32, i32) {
    %c0_i32 = arith.constant 0 : i32
    %c0_i32_0 = arith.constant 0 : i32
    %c0_i32_1 = arith.constant 0 : i32
    return %c0_i32, %c0_i32_0 : i32, i32
  }
  func.func @transform_3(%arg0: i32) -> (i32, i32) {
    %c0_i32 = arith.constant 0 : i32
    %c0_i32_0 = arith.constant 0 : i32
    return %arg0, %c0_i32 : i32, i32
  }
}

</mosaic_0001>

<llo_original>
// kernel: tpu_custom_call.1
$region0: #{tpu_custom_call.1}
  #allocation0 [shape = 'u32[]', space=smem, size = 0x4, offset = 0x4, fixed_abs, tag = 'smem constant byte address 0x4 - core index']
  #allocation1 [shape = 'u32[144,128]{1,0:T(1,128)}', space=vmem, size = 0x12000, scoped, tag = 'internal scratch']
  %s0 = inlined_call_operand.hbm [shape: f32[800,256], index: 0, kind: input, shape index: {}]
  %s1 = inlined_call_operand.vmem [shape: f32[256,32], index: 1, kind: input, shape index: {}]
  %s2 = inlined_call_operand.vmem [shape: f32[1,32], index: 2, kind: input, shape index: {}]
  %s3 = inlined_call_operand.vmem [shape: f32[800,32], index: 3, kind: output, shape index: {}]
  %s4 = sld [smem:[#allocation0]]
  $region26: #{tpu_custom_call.1} parent=0
    _
  %s6 = ssub.s32 1, %s4
  %s7 = scalar_select 0, %s6, %s4
  $region1: #{tpu_custom_call.1} parent=0
    #allocation2 [shape = 'u8[819200]{0}', space=vmem, size = 0xc8000, scoped, tag = 'input window, operand 0, single buffered']
    #allocation3 [shape = 's32[1]{0}', space=sflag, size = 0x4, scoped, tag = 'scoped memory for tpu_custom_call.1']
    %8 = vsyncpa [#allocation3], 0
    // Predicated region
    $region2: #{tpu_custom_call.1} parent=1 // pred_check
      _
    $region3: #{tpu_custom_call.1} parent=1 // pred_check_branch
      %10 = sbr.rel (0) target = $region5
    $region4: #{tpu_custom_call.1} parent=1 // pred_region
      %s12 = ssub.s32 25600, 25600
      %13 = vsyncadd [#allocation3], %s12
      %s14 = sshll.u32 [#allocation2], 4
      %s15 = int_to_ptr.vmem [resolvable:$true] %s14
      %20 = dma.hbm_to_vmem [thread:$0]  %s0, 25600, %s15, [#allocation3], 256, 256, 16
    $region5: #{tpu_custom_call.1} parent=1 // pred_fallthru
      _
    // Predicated region
    $region6: #{tpu_custom_call.1} parent=1 // pred_check
      _
    $region7: #{tpu_custom_call.1} parent=1 // pred_check_branch
      %22 = sbr.rel (0) target = $region9
    $region8: #{tpu_custom_call.1} parent=1 // pred_region
      _
    $region9: #{tpu_custom_call.1} parent=1 // pred_fallthru
      _
    // Predicated region
    $region10: #{tpu_custom_call.1} parent=1 // pred_check
      _
    $region11: #{tpu_custom_call.1} parent=1 // pred_check_branch
      %24 = sbr.rel (0) target = $region13
    $region12: #{tpu_custom_call.1} parent=1 // pred_region
      _
    $region13: #{tpu_custom_call.1} parent=1 // pred_fallthru
      _
    // Predicated region
    $region14: #{tpu_custom_call.1} parent=1 // pred_check
      _
    $region15: #{tpu_custom_call.1} parent=1 // pred_check_branch
      %26 = sbr.rel (0) target = $region17
    $region16: #{tpu_custom_call.1} parent=1 // pred_region
      %27 = dma.done [#allocation3], 25600
    $region17: #{tpu_custom_call.1} parent=1 // pred_fallthru
      _
    %v28 = vld [vmem:[#allocation2] sm:$0xff]
    %v29 = vld [vmem:[#allocation2 + $0x8] sm:$0xff]
    %v30 = vld [vmem:[#allocation2 + $0x10] sm:$0xff]
    %v31 = vld [vmem:[#allocation2 + $0x18] sm:$0xff]
    %v32 = vld [vmem:[#allocation2 + $0x20] sm:$0xff]
    %v33 = vld [vmem:[#allocation2 + $0x28] sm:$0xff]
    %v34 = vld [vmem:[#allocation2 + $0x30] sm:$0xff]
    %v35 = vld [vmem:[#allocation2 + $0x38] sm:$0xff]
    %v36 = vld [vmem:[#allocation2 + $0x40] sm:$0xff]
    %v37 = vld [vmem:[#allocation2 + $0x48] sm:$0xff]
    %v38 = vld [vmem:[#allocation2 + $0x50] sm:$0xff]
    %v39 = vld [vmem:[#allocation2 + $0x58] sm:$0xff]
    %v40 = vld [vmem:[#allocation2 + $0x60] sm:$0xff]
    %v41 = vld [vmem:[#allocation2 + $0x68] sm:$0xff]
    %v42 = vld [vmem:[#allocation2 + $0x70] sm:$0xff]
    %v43 = vld [vmem:[#allocation2 + $0x78] sm:$0xff]
    %v44 = vld [vmem:[#allocation2 + $0x80] sm:$0xff]
    %v45 = vld [vmem:[#allocation2 + $0x88] sm:$0xff]
    %v46 = vld [vmem:[#allocation2 + $0x90] sm:$0xff]
    %v47 = vld [vmem:[#allocation2 + $0x98] sm:$0xff]
    %v48 = vld [vmem:[#allocation2 + $0xa0] sm:$0xff]
    %v49 = vld [vmem:[#allocation2 + $0xa8] sm:$0xff]
    %v50 = vld [vmem:[#allocation2 + $0xb0] sm:$0xff]
    %v51 = vld [vmem:[#allocation2 + $0xb8] sm:$0xff]
    %v52 = vld [vmem:[#allocation2 + $0xc0] sm:$0xff]
    %v53 = vld [vmem:[#allocation2 + $0xc8] sm:$0xff]
    %v54 = vld [vmem:[#allocation2 + $0xd0] sm:$0xff]
    %v55 = vld [vmem:[#allocation2 + $0xd8] sm:$0xff]
    %v56 = vld [vmem:[#allocation2 + $0xe0] sm:$0xff]
    %v57 = vld [vmem:[#allocation2 + $0xe8] sm:$0xff]
    %v58 = vld [vmem:[#allocation2 + $0xf0] sm:$0xff]
    %v59 = vld [vmem:[#allocation2 + $0xf8] sm:$0xff]
    %v60 = vld [vmem:[#allocation2 + $0x100] sm:$0xff]
    %v61 = vld [vmem:[#allocation2 + $0x108] sm:$0xff]
    %v62 = vld [vmem:[#allocation2 + $0x110] sm:$0xff]
    %v63 = vld [vmem:[#allocation2 + $0x118] sm:$0xff]
    %v64 = vld [vmem:[#allocation2 + $0x120] sm:$0xff]
    %v65 = vld [vmem:[#allocation2 + $0x128] sm:$0xff]
    %v66 = vld [vmem:[#allocation2 + $0x130] sm:$0xff]
    %v67 = vld [vmem:[#allocation2 + $0x138] sm:$0xff]
    %v68 = vld [vmem:[#allocation2 + $0x140] sm:$0xff]
    %v69 = vld [vmem:[#allocation2 + $0x148] sm:$0xff]
    %v70 = vld [vmem:[#allocation2 + $0x150] sm:$0xff]
    %v71 = vld [vmem:[#allocation2 + $0x158] sm:$0xff]
    %v72 = vld [vmem:[#allocation2 + $0x160] sm:$0xff]
    %v73 = vld [vmem:[#allocation2 + $0x168] sm:$0xff]
    %v74 = vld [vmem:[#allocation2 + $0x170] sm:$0xff]
    %v75 = vld [vmem:[#allocation2 + $0x178] sm:$0xff]
    %v76 = vld [vmem:[#allocation2 + $0x180] sm:$0xff]
    %v77 = vld [vmem:[#allocation2 + $0x188] sm:$0xff]
    %v78 = vld [vmem:[#allocation2 + $0x190] sm:$0xff]
    %v79 = vld [vmem:[#allocation2 + $0x198] sm:$0xff]
    %v80 = vld [vmem:[#allocation2 + $0x1a0] sm:$0xff]
    %v81 = vld [vmem:[#allocation2 + $0x1a8] sm:$0xff]
    %v82 = vld [vmem:[#allocation2 + $0x1b0] sm:$0xff]
    %v83 = vld [vmem:[#allocation2 + $0x1b8] sm:$0xff]
    %v84 = vld [vmem:[#allocation2 + $0x1c0] sm:$0xff]
    %v85 = vld [vmem:[#allocation2 + $0x1c8] sm:$0xff]
    %v86 = vld [vmem:[#allocation2 + $0x1d0] sm:$0xff]
    %v87 = vld [vmem:[#allocation2 + $0x1d8] sm:$0xff]
    %v88 = vld [vmem:[#allocation2 + $0x1e0] sm:$0xff]
    %v89 = vld [vmem:[#allocation2 + $0x1e8] sm:$0xff]
    %v90 = vld [vmem:[#allocation2 + $0x1f0] sm:$0xff]
    %v91 = vld [vmem:[#allocation2 + $0x1f8] sm:$0xff]
    %v92 = vld [vmem:[#allocation2 + $0x200] sm:$0xff]
    %v93 = vld [vmem:[#allocation2 + $0x208] sm:$0xff]
    %v94 = vld [vmem:[#allocation2 + $0x210] sm:$0xff]
    %v95 = vld [vmem:[#allocation2 + $0x218] sm:$0xff]
    %v96 = vld [vmem:[#allocation2 + $0x220] sm:$0xff]
    %v97 = vld [vmem:[#allocation2 + $0x228] sm:$0xff]
    %v98 = vld [vmem:[#allocation2 + $0x230] sm:$0xff]
    %v99 = vld [vmem:[#allocation2 + $0x238] sm:$0xff]
    %v100 = vld [vmem:[#allocation2 + $0x240] sm:$0xff]
    %v101 = vld [vmem:[#allocation2 + $0x248] sm:$0xff]
    %v102 = vld [vmem:[#allocation2 + $0x250] sm:$0xff]
    %v103 = vld [vmem:[#allocation2 + $0x258] sm:$0xff]
    %v104 = vld [vmem:[#allocation2 + $0x260] sm:$0xff]
    %v105 = vld [vmem:[#allocation2 + $0x268] sm:$0xff]
    %v106 = vld [vmem:[#allocation2 + $0x270] sm:$0xff]
    %v107 = vld [vmem:[#allocation2 + $0x278] sm:$0xff]
    %v108 = vld [vmem:[#allocation2 + $0x280] sm:$0xff]
    %v109 = vld [vmem:[#allocation2 + $0x288] sm:$0xff]
    %v110 = vld [vmem:[#allocation2 + $0x290] sm:$0xff]
    %v111 = vld [vmem:[#allocation2 + $0x298] sm:$0xff]
    %v112 = vld [vmem:[#allocation2 + $0x2a0] sm:$0xff]
    %v113 = vld [vmem:[#allocation2 + $0x2a8] sm:$0xff]
    %v114 = vld [vmem:[#allocation2 + $0x2b0] sm:$0xff]
    %v115 = vld [vmem:[#allocation2 + $0x2b8] sm:$0xff]
    %v116 = vld [vmem:[#allocation2 + $0x2c0] sm:$0xff]
    %v117 = vld [vmem:[#allocation2 + $0x2c8] sm:$0xff]
    %v118 = vld [vmem:[#allocation2 + $0x2d0] sm:$0xff]
    %v119 = vld [vmem:[#allocation2 + $0x2d8] sm:$0xff]
    %v120 = vld [vmem:[#allocation2 + $0x2e0] sm:$0xff]
    %v121 = vld [vmem:[#allocation2 + $0x2e8] sm:$0xff]
    %v122 = vld [vmem:[#allocation2 + $0x2f0] sm:$0xff]
    %v123 = vld [vmem:[#allocation2 + $0x2f8] sm:$0xff]
    %v124 = vld [vmem:[#allocation2 + $0x300] sm:$0xff]
    %v125 = vld [vmem:[#allocation2 + $0x308] sm:$0xff]
    %v126 = vld [vmem:[#allocation2 + $0x310] sm:$0xff]
    %v127 = vld [vmem:[#allocation2 + $0x318] sm:$0xff]
    %v128 = vld [vmem:[#allocation2 + $0x320] sm:$0xff]
    %v129 = vld [vmem:[#allocation2 + $0x328] sm:$0xff]
    %v130 = vld [vmem:[#allocation2 + $0x330] sm:$0xff]
    %v131 = vld [vmem:[#allocation2 + $0x338] sm:$0xff]
    %v132 = vld [vmem:[#allocation2 + $0x340] sm:$0xff]
    %v133 = vld [vmem:[#allocation2 + $0x348] sm:$0xff]
    %v134 = vld [vmem:[#allocation2 + $0x350] sm:$0xff]
    %v135 = vld [vmem:[#allocation2 + $0x358] sm:$0xff]
    %v136 = vld [vmem:[#allocation2 + $0x360] sm:$0xff]
    %v137 = vld [vmem:[#allocation2 + $0x368] sm:$0xff]
    %v138 = vld [vmem:[#allocation2 + $0x370] sm:$0xff]
    %v139 = vld [vmem:[#allocation2 + $0x378] sm:$0xff]
    %v140 = vld [vmem:[#allocation2 + $0x380] sm:$0xff]
    %v141 = vld [vmem:[#allocation2 + $0x388] sm:$0xff]
    %v142 = vld [vmem:[#allocation2 + $0x390] sm:$0xff]
    %v143 = vld [vmem:[#allocation2 + $0x398] sm:$0xff]
    %v144 = vld [vmem:[#allocation2 + $0x3a0] sm:$0xff]
    %v145 = vld [vmem:[#allocation2 + $0x3a8] sm:$0xff]
    %v146 = vld [vmem:[#allocation2 + $0x3b0] sm:$0xff]
    %v147 = vld [vmem:[#allocation2 + $0x3b8] sm:$0xff]
    %v148 = vld [vmem:[#allocation2 + $0x3c0] sm:$0xff]
    %v149 = vld [vmem:[#allocation2 + $0x3c8] sm:$0xff]
    %v150 = vld [vmem:[#allocation2 + $0x3d0] sm:$0xff]
    %v151 = vld [vmem:[#allocation2 + $0x3d8] sm:$0xff]
    %v152 = vld [vmem:[#allocation2 + $0x3e0] sm:$0xff]
    %v153 = vld [vmem:[#allocation2 + $0x3e8] sm:$0xff]
    %v154 = vld [vmem:[#allocation2 + $0x3f0] sm:$0xff]
    %v155 = vld [vmem:[#allocation2 + $0x3f8] sm:$0xff]
    %v156 = vld [vmem:[#allocation2 + $0x400] sm:$0xff]
    %v157 = vld [vmem:[#allocation2 + $0x408] sm:$0xff]
    %v158 = vld [vmem:[#allocation2 + $0x410] sm:$0xff]
    %v159 = vld [vmem:[#allocation2 + $0x418] sm:$0xff]
    %v160 = vld [vmem:[#allocation2 + $0x420] sm:$0xff]
    %v161 = vld [vmem:[#allocation2 + $0x428] sm:$0xff]
    %v162 = vld [vmem:[#allocation2 + $0x430] sm:$0xff]
    %v163 = vld [vmem:[#allocation2 + $0x438] sm:$0xff]
    %v164 = vld [vmem:[#allocation2 + $0x440] sm:$0xff]
    %v165 = vld [vmem:[#allocation2 + $0x448] sm:$0xff]
    %v166 = vld [vmem:[#allocation2 + $0x450] sm:$0xff]
    %v167 = vld [vmem:[#allocation2 + $0x458] sm:$0xff]
    %v168 = vld [vmem:[#allocation2 + $0x460] sm:$0xff]
    %v169 = vld [vmem:[#allocation2 + $0x468] sm:$0xff]
    %v170 = vld [vmem:[#allocation2 + $0x470] sm:$0xff]
    %v171 = vld [vmem:[#allocation2 + $0x478] sm:$0xff]
    %v172 = vld [vmem:[#allocation2 + $0x480] sm:$0xff]
    %v173 = vld [vmem:[#allocation2 + $0x488] sm:$0xff]
    %v174 = vld [vmem:[#allocation2 + $0x490] sm:$0xff]
    %v175 = vld [vmem:[#allocation2 + $0x498] sm:$0xff]
    %v176 = vld [vmem:[#allocation2 + $0x4a0] sm:$0xff]
    %v177 = vld [vmem:[#allocation2 + $0x4a8] sm:$0xff]
    %v178 = vld [vmem:[#allocation2 + $0x4b0] sm:$0xff]
    %v179 = vld [vmem:[#allocation2 + $0x4b8] sm:$0xff]
    %v180 = vld [vmem:[#allocation2 + $0x4c0] sm:$0xff]
    %v181 = vld [vmem:[#allocation2 + $0x4c8] sm:$0xff]
    %v182 = vld [vmem:[#allocation2 + $0x4d0] sm:$0xff]
    %v183 = vld [vmem:[#allocation2 + $0x4d8] sm:$0xff]
    %v184 = vld [vmem:[#allocation2 + $0x4e0] sm:$0xff]
    %v185 = vld [vmem:[#allocation2 + $0x4e8] sm:$0xff]
    %v186 = vld [vmem:[#allocation2 + $0x4f0] sm:$0xff]
    %v187 = vld [vmem:[#allocation2 + $0x4f8] sm:$0xff]
    %v188 = vld [vmem:[#allocation2 + $0x500] sm:$0xff]
    %v189 = vld [vmem:[#allocation2 + $0x508] sm:$0xff]
    %v190 = vld [vmem:[#allocation2 + $0x510] sm:$0xff]
    %v191 = vld [vmem:[#allocation2 + $0x518] sm:$0xff]
    %v192 = vld [vmem:[#allocation2 + $0x520] sm:$0xff]
    %v193 = vld [vmem:[#allocation2 + $0x528] sm:$0xff]
    %v194 = vld [vmem:[#allocation2 + $0x530] sm:$0xff]
    %v195 = vld [vmem:[#allocation2 + $0x538] sm:$0xff]
    %v196 = vld [vmem:[#allocation2 + $0x540] sm:$0xff]
    %v197 = vld [vmem:[#allocation2 + $0x548] sm:$0xff]
    %v198 = vld [vmem:[#allocation2 + $0x550] sm:$0xff]
    %v199 = vld [vmem:[#allocation2 + $0x558] sm:$0xff]
    %v200 = vld [vmem:[#allocation2 + $0x560] sm:$0xff]
    %v201 = vld [vmem:[#allocation2 + $0x568] sm:$0xff]
    %v202 = vld [vmem:[#allocation2 + $0x570] sm:$0xff]
    %v203 = vld [vmem:[#allocation2 + $0x578] sm:$0xff]
    %v204 = vld [vmem:[#allocation2 + $0x580] sm:$0xff]
    %v205 = vld [vmem:[#allocation2 + $0x588] sm:$0xff]
    %v206 = vld [vmem:[#allocation2 + $0x590] sm:$0xff]
    %v207 = vld [vmem:[#allocation2 + $0x598] sm:$0xff]
    %v208 = vld [vmem:[#allocation2 + $0x5a0] sm:$0xff]
    %v209 = vld [vmem:[#allocation2 + $0x5a8] sm:$0xff]
    %v210 = vld [vmem:[#allocation2 + $0x5b0] sm:$0xff]
    %v211 = vld [vmem:[#allocation2 + $0x5b8] sm:$0xff]
    %v212 = vld [vmem:[#allocation2 + $0x5c0] sm:$0xff]
    %v213 = vld [vmem:[#allocation2 + $0x5c8] sm:$0xff]
    %v214 = vld [vmem:[#allocation2 + $0x5d0] sm:$0xff]
    %v215 = vld [vmem:[#allocation2 + $0x5d8] sm:$0xff]
    %v216 = vld [vmem:[#allocation2 + $0x5e0] sm:$0xff]
    %v217 = vld [vmem:[#allocation2 + $0x5e8] sm:$0xff]
    %v218 = vld [vmem:[#allocation2 + $0x5f0] sm:$0xff]
    %v219 = vld [vmem:[#allocation2 + $0x5f8] sm:$0xff]
    %v220 = vld [vmem:[#allocation2 + $0x600] sm:$0xff]
    %v221 = vld [vmem:[#allocation2 + $0x608] sm:$0xff]
    %v222 = vld [vmem:[#allocation2 + $0x610] sm:$0xff]
    %v223 = vld [vmem:[#allocation2 + $0x618] sm:$0xff]
    %v224 = vld [vmem:[#allocation2 + $0x620] sm:$0xff]
    %v225 = vld [vmem:[#allocation2 + $0x628] sm:$0xff]
    %v226 = vld [vmem:[#allocation2 + $0x630] sm:$0xff]
    %v227 = vld [vmem:[#allocation2 + $0x638] sm:$0xff]
    %v228 = vld [vmem:[%s1] sm:$0xff]
    %v229 = vld [vmem:[%s1 + $0x8] sm:$0xff]
    %v230 = vld [vmem:[%s1 + $0x10] sm:$0xff]
    %v231 = vld [vmem:[%s1 + $0x18] sm:$0xff]
    %v232 = vld [vmem:[%s1 + $0x20] sm:$0xff]
    %v233 = vld [vmem:[%s1 + $0x28] sm:$0xff]
    %v234 = vld [vmem:[%s1 + $0x30] sm:$0xff]
    %v235 = vld [vmem:[%s1 + $0x38] sm:$0xff]
    %v236 = vld [vmem:[%s1 + $0x40] sm:$0xff]
    %v237 = vld [vmem:[%s1 + $0x48] sm:$0xff]
    %v238 = vld [vmem:[%s1 + $0x50] sm:$0xff]
    %v239 = vld [vmem:[%s1 + $0x58] sm:$0xff]
    %v240 = vld [vmem:[%s1 + $0x60] sm:$0xff]
    %v241 = vld [vmem:[%s1 + $0x68] sm:$0xff]
    %v242 = vld [vmem:[%s1 + $0x70] sm:$0xff]
    %v243 = vld [vmem:[%s1 + $0x78] sm:$0xff]
    %v244 = vld [vmem:[%s1 + $0x80] sm:$0xff]
    %v245 = vld [vmem:[%s1 + $0x88] sm:$0xff]
    %v246 = vld [vmem:[%s1 + $0x90] sm:$0xff]
    %v247 = vld [vmem:[%s1 + $0x98] sm:$0xff]
    %v248 = vld [vmem:[%s1 + $0xa0] sm:$0xff]
    %v249 = vld [vmem:[%s1 + $0xa8] sm:$0xff]
    %v250 = vld [vmem:[%s1 + $0xb0] sm:$0xff]
    %v251 = vld [vmem:[%s1 + $0xb8] sm:$0xff]
    %v252 = vld [vmem:[%s1 + $0xc0] sm:$0xff]
    %v253 = vld [vmem:[%s1 + $0xc8] sm:$0xff]
    %v254 = vld [vmem:[%s1 + $0xd0] sm:$0xff]
    %v255 = vld [vmem:[%s1 + $0xd8] sm:$0xff]
    %v256 = vld [vmem:[%s1 + $0xe0] sm:$0xff]
    %v257 = vld [vmem:[%s1 + $0xe8] sm:$0xff]
    %v258 = vld [vmem:[%s1 + $0xf0] sm:$0xff]
    %v259 = vld [vmem:[%s1 + $0xf8] sm:$0xff]
    %v260 = vld [vmem:[%s2] sm:$0x1]
    %v262 = vlaneseq
    %v263 = vshrl.u32 %v262, 7
    %v264 = vsub.s32 0, %v263
    %v265 = vrot.slane %v260, %v264
    %267 = vmatprep.subr.mxu0 0.0
    %268 = vmatpush1.msra.mxu0 %v243
    %269 = vmatprep.subr.mxu0 0.0
    %270 = vmatpush1.msra.mxu0 %v242
    %271 = vmatprep.subr.mxu0 0.0
    %272 = vmatpush1.msra.mxu0 %v241
    %273 = vmatprep.subr.mxu0 0.0
    %274 = vmatpush1.msra.mxu0 %v240
    %275 = vmatprep.subr.mxu0 0.0
    %276 = vmatpush1.msra.mxu0 %v239
    %277 = vmatprep.subr.mxu0 0.0
    %278 = vmatpush1.msra.mxu0 %v238
    %279 = vmatprep.subr.mxu0 0.0
    %280 = vmatpush1.msra.mxu0 %v237
    %281 = vmatprep.subr.mxu0 0.0
    %282 = vmatpush1.msra.mxu0 %v236
    %283 = vmatprep.subr.mxu0 0.0
    %284 = vmatpush1.msra.mxu0 %v235
    %285 = vmatprep.subr.mxu0 0.0
    %286 = vmatpush1.msra.mxu0 %v234
    %287 = vmatprep.subr.mxu0 0.0
    %288 = vmatpush1.msra.mxu0 %v233
    %289 = vmatprep.subr.mxu0 0.0
    %290 = vmatpush1.msra.mxu0 %v232
    %291 = vmatprep.subr.mxu0 0.0
    %292 = vmatpush1.msra.mxu0 %v231
    %293 = vmatprep.subr.mxu0 0.0
    %294 = vmatpush1.msra.mxu0 %v230
    %295 = vmatprep.subr.mxu0 0.0
    %296 = vmatpush1.msra.mxu0 %v229
    %297 = vmatprep.subr.mxu0 0.0
    %298 = vmatpush1.msra.mxu0 %v228
    %299 = vmatprep.subr.mxu0 0.0
    %300 = vmatpush2.msra.mxu0 %v259
    %301 = vmatprep.subr.mxu0 0.0
    %302 = vmatpush2.msra.mxu0 %v258
    %303 = vmatprep.subr.mxu0 0.0
    %304 = vmatpush2.msra.mxu0 %v257
    %305 = vmatprep.subr.mxu0 0.0
    %306 = vmatpush2.msra.mxu0 %v256
    %307 = vmatprep.subr.mxu0 0.0
    %308 = vmatpush2.msra.mxu0 %v255
    %309 = vmatprep.subr.mxu0 0.0
    %310 = vmatpush2.msra.mxu0 %v254
    %311 = vmatprep.subr.mxu0 0.0
    %312 = vmatpush2.msra.mxu0 %v253
    %313 = vmatprep.subr.mxu0 0.0
    %314 = vmatpush2.msra.mxu0 %v252
    %315 = vmatprep.subr.mxu0 0.0
    %316 = vmatpush2.msra.mxu0 %v251
    %317 = vmatprep.subr.mxu0 0.0
    %318 = vmatpush2.msra.mxu0 %v250
    %319 = vmatprep.subr.mxu0 0.0
    %320 = vmatpush2.msra.mxu0 %v249
    %321 = vmatprep.subr.mxu0 0.0
    %322 = vmatpush2.msra.mxu0 %v248
    %323 = vmatprep.subr.mxu0 0.0
    %324 = vmatpush2.msra.mxu0 %v247
    %325 = vmatprep.subr.mxu0 0.0
    %326 = vmatpush2.msra.mxu0 %v246
    %327 = vmatprep.subr.mxu0 0.0
    %328 = vmatpush2.msra.mxu0 %v245
    %329 = vmatprep.subr.mxu0 0.0
    %330 = vmatpush2.msra.mxu0 %v244
    %331 = vmatprep.mubr.f32.mxu0 %v29
    %332 = vmatmul.mubr.f32.gmra.mxu0 %v28
    %v333 = vpop.f32.mrf.mxu0
    %v334 = vadd.f32 %v265, %v333
    %v335 = vpop.f32.mrf.mxu0
    %336 = vmatprep.mubr.f32.mxu0 %v31
    %337 = vmatmul.mubr.f32.gmra.mxu0 %v30
    %v338 = vpop.f32.mrf.mxu0
    %v339 = vadd.f32 %v265, %v338
    %v340 = vpop.f32.mrf.mxu0
    %341 = vmatprep.mubr.f32.mxu0 %v33
    %342 = vmatmul.mubr.f32.gmra.mxu0 %v32
    %v343 = vpop.f32.mrf.mxu0
    %v344 = vadd.f32 %v265, %v343
    %v345 = vpop.f32.mrf.mxu0
    %346 = vmatprep.mubr.f32.mxu0 %v35
    %347 = vmatmul.mubr.f32.gmra.mxu0 %v34
    %v348 = vpop.f32.mrf.mxu0
    %v349 = vadd.f32 %v265, %v348
    %v350 = vpop.f32.mrf.mxu0
    %351 = vmatprep.mubr.f32.mxu0 %v37
    %352 = vmatmul.mubr.f32.gmra.mxu0 %v36
    %v353 = vpop.f32.mrf.mxu0
    %v354 = vadd.f32 %v265, %v353
    %v355 = vpop.f32.mrf.mxu0
    %356 = vmatprep.mubr.f32.mxu0 %v39
    %357 = vmatmul.mubr.f32.gmra.mxu0 %v38
    %v358 = vpop.f32.mrf.mxu0
    %v359 = vadd.f32 %v265, %v358
    %v360 = vpop.f32.mrf.mxu0
    %361 = vmatprep.mubr.f32.mxu0 %v41
    %362 = vmatmul.mubr.f32.gmra.mxu0 %v40
    %v363 = vpop.f32.mrf.mxu0
    %v364 = vadd.f32 %v265, %v363
    %v365 = vpop.f32.mrf.mxu0
    %366 = vmatprep.mubr.f32.mxu0 %v43
    %367 = vmatmul.mubr.f32.gmra.mxu0 %v42
    %v368 = vpop.f32.mrf.mxu0
    %v369 = vadd.f32 %v265, %v368
    %v370 = vpop.f32.mrf.mxu0
    %371 = vmatprep.mubr.f32.mxu0 %v45
    %372 = vmatmul.mubr.f32.gmra.mxu0 %v44
    %v373 = vpop.f32.mrf.mxu0
    %v374 = vadd.f32 %v265, %v373
    %v375 = vpop.f32.mrf.mxu0
    %376 = vmatprep.mubr.f32.mxu0 %v47
    %377 = vmatmul.mubr.f32.gmra.mxu0 %v46
    %v378 = vpop.f32.mrf.mxu0
    %v379 = vadd.f32 %v265, %v378
    %v380 = vpop.f32.mrf.mxu0
    %381 = vmatprep.mubr.f32.mxu0 %v49
    %382 = vmatmul.mubr.f32.gmra.mxu0 %v48
    %v383 = vpop.f32.mrf.mxu0
    %v384 = vadd.f32 %v265, %v383
    %v385 = vpop.f32.mrf.mxu0
    %386 = vmatprep.mubr.f32.mxu0 %v51
    %387 = vmatmul.mubr.f32.gmra.mxu0 %v50
    %v388 = vpop.f32.mrf.mxu0
    %v389 = vadd.f32 %v265, %v388
    %v390 = vpop.f32.mrf.mxu0
    %391 = vmatprep.mubr.f32.mxu0 %v53
    %392 = vmatmul.mubr.f32.gmra.mxu0 %v52
    %v393 = vpop.f32.mrf.mxu0
    %v394 = vadd.f32 %v265, %v393
    %v395 = vpop.f32.mrf.mxu0
    %396 = vmatprep.mubr.f32.mxu0 %v55
    %397 = vmatmul.mubr.f32.gmra.mxu0 %v54
    %v398 = vpop.f32.mrf.mxu0
    %v399 = vadd.f32 %v265, %v398
    %v400 = vpop.f32.mrf.mxu0
    %401 = vmatprep.mubr.f32.mxu0 %v57
    %402 = vmatmul.mubr.f32.gmra.mxu0 %v56
    %v403 = vpop.f32.mrf.mxu0
    %v404 = vadd.f32 %v265, %v403
    %v405 = vpop.f32.mrf.mxu0
    %406 = vmatprep.mubr.f32.mxu0 %v59
    %407 = vmatmul.mubr.f32.gmra.mxu0 %v58
    %v408 = vpop.f32.mrf.mxu0
    %v409 = vadd.f32 %v265, %v408
    %v410 = vpop.f32.mrf.mxu0
    %411 = vmatprep.mubr.f32.mxu0 %v61
    %412 = vmatmul.mubr.f32.gmra.mxu0 %v60
    %v413 = vpop.f32.mrf.mxu0
    %v414 = vadd.f32 %v265, %v413
    %v415 = vpop.f32.mrf.mxu0
    %416 = vmatprep.mubr.f32.mxu0 %v63
    %417 = vmatmul.mubr.f32.gmra.mxu0 %v62
    %v418 = vpop.f32.mrf.mxu0
    %v419 = vadd.f32 %v265, %v418
    %v420 = vpop.f32.mrf.mxu0
    %421 = vmatprep.mubr.f32.mxu0 %v65
    %422 = vmatmul.mubr.f32.gmra.mxu0 %v64
    %v423 = vpop.f32.mrf.mxu0
    %v424 = vadd.f32 %v265, %v423
    %v425 = vpop.f32.mrf.mxu0
    %426 = vmatprep.mubr.f32.mxu0 %v67
    %427 = vmatmul.mubr.f32.gmra.mxu0 %v66
    %v428 = vpop.f32.mrf.mxu0
    %v429 = vadd.f32 %v265, %v428
    %v430 = vpop.f32.mrf.mxu0
    %431 = vmatprep.mubr.f32.mxu0 %v69
    %432 = vmatmul.mubr.f32.gmra.mxu0 %v68
    %v433 = vpop.f32.mrf.mxu0
    %v434 = vadd.f32 %v265, %v433
    %v435 = vpop.f32.mrf.mxu0
    %436 = vmatprep.mubr.f32.mxu0 %v71
    %437 = vmatmul.mubr.f32.gmra.mxu0 %v70
    %v438 = vpop.f32.mrf.mxu0
    %v439 = vadd.f32 %v265, %v438
    %v440 = vpop.f32.mrf.mxu0
    %441 = vmatprep.mubr.f32.mxu0 %v73
    %442 = vmatmul.mubr.f32.gmra.mxu0 %v72
    %v443 = vpop.f32.mrf.mxu0
    %v444 = vadd.f32 %v265, %v443
    %v445 = vpop.f32.mrf.mxu0
    %446 = vmatprep.mubr.f32.mxu0 %v75
    %447 = vmatmul.mubr.f32.gmra.mxu0 %v74
    %v448 = vpop.f32.mrf.mxu0
    %v449 = vadd.f32 %v265, %v448
    %v450 = vpop.f32.mrf.mxu0
    %451 = vmatprep.mubr.f32.mxu0 %v77
    %452 = vmatmul.mubr.f32.gmra.mxu0 %v76
    %v453 = vpop.f32.mrf.mxu0
    %v454 = vadd.f32 %v265, %v453
    %v455 = vpop.f32.mrf.mxu0
    %456 = vmatprep.mubr.f32.mxu0 %v79
    %457 = vmatmul.mubr.f32.gmra.mxu0 %v78
    %v458 = vpop.f32.mrf.mxu0
    %v459 = vadd.f32 %v265, %v458
    %v460 = vpop.f32.mrf.mxu0
    %461 = vmatprep.mubr.f32.mxu0 %v81
    %462 = vmatmul.mubr.f32.gmra.mxu0 %v80
    %v463 = vpop.f32.mrf.mxu0
    %v464 = vadd.f32 %v265, %v463
    %v465 = vpop.f32.mrf.mxu0
    %466 = vmatprep.mubr.f32.mxu0 %v83
    %467 = vmatmul.mubr.f32.gmra.mxu0 %v82
    %v468 = vpop.f32.mrf.mxu0
    %v469 = vadd.f32 %v265, %v468
    %v470 = vpop.f32.mrf.mxu0
    %471 = vmatprep.mubr.f32.mxu0 %v85
    %472 = vmatmul.mubr.f32.gmra.mxu0 %v84
    %v473 = vpop.f32.mrf.mxu0
    %v474 = vadd.f32 %v265, %v473
    %v475 = vpop.f32.mrf.mxu0
    %476 = vmatprep.mubr.f32.mxu0 %v87
    %477 = vmatmul.mubr.f32.gmra.mxu0 %v86
    %v478 = vpop.f32.mrf.mxu0
    %v479 = vadd.f32 %v265, %v478
    %v480 = vpop.f32.mrf.mxu0
    %481 = vmatprep.mubr.f32.mxu0 %v89
    %482 = vmatmul.mubr.f32.gmra.mxu0 %v88
    %v483 = vpop.f32.mrf.mxu0
    %v484 = vadd.f32 %v265, %v483
    %v485 = vpop.f32.mrf.mxu0
    %486 = vmatprep.mubr.f32.mxu0 %v91
    %487 = vmatmul.mubr.f32.gmra.mxu0 %v90
    %v488 = vpop.f32.mrf.mxu0
    %v489 = vadd.f32 %v265, %v488
    %v490 = vpop.f32.mrf.mxu0
    %491 = vmatprep.mubr.f32.mxu0 %v93
    %492 = vmatmul.mubr.f32.gmra.mxu0 %v92
    %v493 = vpop.f32.mrf.mxu0
    %v494 = vadd.f32 %v265, %v493
    %v495 = vpop.f32.mrf.mxu0
    %496 = vmatprep.mubr.f32.mxu0 %v95
    %497 = vmatmul.mubr.f32.gmra.mxu0 %v94
    %v498 = vpop.f32.mrf.mxu0
    %v499 = vadd.f32 %v265, %v498
    %v500 = vpop.f32.mrf.mxu0
    %501 = vmatprep.mubr.f32.mxu0 %v97
    %502 = vmatmul.mubr.f32.gmra.mxu0 %v96
    %v503 = vpop.f32.mrf.mxu0
    %v504 = vadd.f32 %v265, %v503
    %v505 = vpop.f32.mrf.mxu0
    %506 = vmatprep.mubr.f32.mxu0 %v99
    %507 = vmatmul.mubr.f32.gmra.mxu0 %v98
    %v508 = vpop.f32.mrf.mxu0
    %v509 = vadd.f32 %v265, %v508
    %v510 = vpop.f32.mrf.mxu0
    %511 = vmatprep.mubr.f32.mxu0 %v101
    %512 = vmatmul.mubr.f32.gmra.mxu0 %v100
    %v513 = vpop.f32.mrf.mxu0
    %v514 = vadd.f32 %v265, %v513
    %v515 = vpop.f32.mrf.mxu0
    %516 = vmatprep.mubr.f32.mxu0 %v103
    %517 = vmatmul.mubr.f32.gmra.mxu0 %v102
    %v518 = vpop.f32.mrf.mxu0
    %v519 = vadd.f32 %v265, %v518
    %v520 = vpop.f32.mrf.mxu0
    %521 = vmatprep.mubr.f32.mxu0 %v105
    %522 = vmatmul.mubr.f32.gmra.mxu0 %v104
    %v523 = vpop.f32.mrf.mxu0
    %v524 = vadd.f32 %v265, %v523
    %v525 = vpop.f32.mrf.mxu0
    %526 = vmatprep.mubr.f32.mxu0 %v107
    %527 = vmatmul.mubr.f32.gmra.mxu0 %v106
    %v528 = vpop.f32.mrf.mxu0
    %v529 = vadd.f32 %v265, %v528
    %v530 = vpop.f32.mrf.mxu0
    %531 = vmatprep.mubr.f32.mxu0 %v109
    %532 = vmatmul.mubr.f32.gmra.mxu0 %v108
    %v533 = vpop.f32.mrf.mxu0
    %v534 = vadd.f32 %v265, %v533
    %v535 = vpop.f32.mrf.mxu0
    %536 = vmatprep.mubr.f32.mxu0 %v111
    %537 = vmatmul.mubr.f32.gmra.mxu0 %v110
    %v538 = vpop.f32.mrf.mxu0
    %v539 = vadd.f32 %v265, %v538
    %v540 = vpop.f32.mrf.mxu0
    %541 = vmatprep.mubr.f32.mxu0 %v113
    %542 = vmatmul.mubr.f32.gmra.mxu0 %v112
    %v543 = vpop.f32.mrf.mxu0
    %v544 = vadd.f32 %v265, %v543
    %v545 = vpop.f32.mrf.mxu0
    %546 = vmatprep.mubr.f32.mxu0 %v115
    %547 = vmatmul.mubr.f32.gmra.mxu0 %v114
    %v548 = vpop.f32.mrf.mxu0
    %v549 = vadd.f32 %v265, %v548
    %v550 = vpop.f32.mrf.mxu0
    %551 = vmatprep.mubr.f32.mxu0 %v117
    %552 = vmatmul.mubr.f32.gmra.mxu0 %v116
    %v553 = vpop.f32.mrf.mxu0
    %v554 = vadd.f32 %v265, %v553
    %v555 = vpop.f32.mrf.mxu0
    %556 = vmatprep.mubr.f32.mxu0 %v119
    %557 = vmatmul.mubr.f32.gmra.mxu0 %v118
    %v558 = vpop.f32.mrf.mxu0
    %v559 = vadd.f32 %v265, %v558
    %v560 = vpop.f32.mrf.mxu0
    %561 = vmatprep.mubr.f32.mxu0 %v121
    %562 = vmatmul.mubr.f32.gmra.mxu0 %v120
    %v563 = vpop.f32.mrf.mxu0
    %v564 = vadd.f32 %v265, %v563
    %v565 = vpop.f32.mrf.mxu0
    %566 = vmatprep.mubr.f32.mxu0 %v123
    %567 = vmatmul.mubr.f32.gmra.mxu0 %v122
    %v568 = vpop.f32.mrf.mxu0
    %v569 = vadd.f32 %v265, %v568
    %v570 = vpop.f32.mrf.mxu0
    %571 = vmatprep.mubr.f32.mxu0 %v125
    %572 = vmatmul.mubr.f32.gmra.mxu0 %v124
    %v573 = vpop.f32.mrf.mxu0
    %v574 = vadd.f32 %v265, %v573
    %v575 = vpop.f32.mrf.mxu0
    %576 = vmatprep.mubr.f32.mxu0 %v127
    %577 = vmatmul.mubr.f32.gmra.mxu0 %v126
    %v578 = vpop.f32.mrf.mxu0
    %v579 = vadd.f32 %v265, %v578
    %v580 = vpop.f32.mrf.mxu0
    %581 = vmatprep.mubr.f32.mxu0 %v129
    %582 = vmatmul.mubr.f32.gmra.mxu0 %v128
    %v583 = vpop.f32.mrf.mxu0
    %v584 = vadd.f32 %v265, %v583
    %v585 = vpop.f32.mrf.mxu0
    %586 = vmatprep.mubr.f32.mxu0 %v131
    %587 = vmatmul.mubr.f32.gmra.mxu0 %v130
    %v588 = vpop.f32.mrf.mxu0
    %v589 = vadd.f32 %v265, %v588
    %v590 = vpop.f32.mrf.mxu0
    %591 = vmatprep.mubr.f32.mxu0 %v133
    %592 = vmatmul.mubr.f32.gmra.mxu0 %v132
    %v593 = vpop.f32.mrf.mxu0
    %v594 = vadd.f32 %v265, %v593
    %v595 = vpop.f32.mrf.mxu0
    %596 = vmatprep.mubr.f32.mxu0 %v135
    %597 = vmatmul.mubr.f32.gmra.mxu0 %v134
    %v598 = vpop.f32.mrf.mxu0
    %v599 = vadd.f32 %v265, %v598
    %v600 = vpop.f32.mrf.mxu0
    %601 = vmatprep.mubr.f32.mxu0 %v137
    %602 = vmatmul.mubr.f32.gmra.mxu0 %v136
    %v603 = vpop.f32.mrf.mxu0
    %v604 = vadd.f32 %v265, %v603
    %v605 = vpop.f32.mrf.mxu0
    %606 = vmatprep.mubr.f32.mxu0 %v139
    %607 = vmatmul.mubr.f32.gmra.mxu0 %v138
    %v608 = vpop.f32.mrf.mxu0
    %v609 = vadd.f32 %v265, %v608
    %v610 = vpop.f32.mrf.mxu0
    %611 = vmatprep.mubr.f32.mxu0 %v141
    %612 = vmatmul.mubr.f32.gmra.mxu0 %v140
    %v613 = vpop.f32.mrf.mxu0
    %v614 = vadd.f32 %v265, %v613
    %v615 = vpop.f32.mrf.mxu0
    %616 = vmatprep.mubr.f32.mxu0 %v143
    %617 = vmatmul.mubr.f32.gmra.mxu0 %v142
    %v618 = vpop.f32.mrf.mxu0
    %v619 = vadd.f32 %v265, %v618
    %v620 = vpop.f32.mrf.mxu0
    %621 = vmatprep.mubr.f32.mxu0 %v145
    %622 = vmatmul.mubr.f32.gmra.mxu0 %v144
    %v623 = vpop.f32.mrf.mxu0
    %v624 = vadd.f32 %v265, %v623
    %v625 = vpop.f32.mrf.mxu0
    %626 = vmatprep.mubr.f32.mxu0 %v147
    %627 = vmatmul.mubr.f32.gmra.mxu0 %v146
    %v628 = vpop.f32.mrf.mxu0
    %v629 = vadd.f32 %v265, %v628
    %v630 = vpop.f32.mrf.mxu0
    %631 = vmatprep.mubr.f32.mxu0 %v149
    %632 = vmatmul.mubr.f32.gmra.mxu0 %v148
    %v633 = vpop.f32.mrf.mxu0
    %v634 = vadd.f32 %v265, %v633
    %v635 = vpop.f32.mrf.mxu0
    %636 = vmatprep.mubr.f32.mxu0 %v151
    %637 = vmatmul.mubr.f32.gmra.mxu0 %v150
    %v638 = vpop.f32.mrf.mxu0
    %v639 = vadd.f32 %v265, %v638
    %v640 = vpop.f32.mrf.mxu0
    %641 = vmatprep.mubr.f32.mxu0 %v153
    %642 = vmatmul.mubr.f32.gmra.mxu0 %v152
    %v643 = vpop.f32.mrf.mxu0
    %v644 = vadd.f32 %v265, %v643
    %v645 = vpop.f32.mrf.mxu0
    %646 = vmatprep.mubr.f32.mxu0 %v155
    %647 = vmatmul.mubr.f32.gmra.mxu0 %v154
    %v648 = vpop.f32.mrf.mxu0
    %v649 = vadd.f32 %v265, %v648
    %v650 = vpop.f32.mrf.mxu0
    %651 = vmatprep.mubr.f32.mxu0 %v157
    %652 = vmatmul.mubr.f32.gmra.mxu0 %v156
    %v653 = vpop.f32.mrf.mxu0
    %v654 = vadd.f32 %v265, %v653
    %v655 = vpop.f32.mrf.mxu0
    %656 = vmatprep.mubr.f32.mxu0 %v159
    %657 = vmatmul.mubr.f32.gmra.mxu0 %v158
    %v658 = vpop.f32.mrf.mxu0
    %v659 = vadd.f32 %v265, %v658
    %v660 = vpop.f32.mrf.mxu0
    %661 = vmatprep.mubr.f32.mxu0 %v161
    %662 = vmatmul.mubr.f32.gmra.mxu0 %v160
    %v663 = vpop.f32.mrf.mxu0
    %v664 = vadd.f32 %v265, %v663
    %v665 = vpop.f32.mrf.mxu0
    %666 = vmatprep.mubr.f32.mxu0 %v163
    %667 = vmatmul.mubr.f32.gmra.mxu0 %v162
    %v668 = vpop.f32.mrf.mxu0
    %v669 = vadd.f32 %v265, %v668
    %v670 = vpop.f32.mrf.mxu0
    %671 = vmatprep.mubr.f32.mxu0 %v165
    %672 = vmatmul.mubr.f32.gmra.mxu0 %v164
    %v673 = vpop.f32.mrf.mxu0
    %v674 = vadd.f32 %v265, %v673
    %v675 = vpop.f32.mrf.mxu0
    %676 = vmatprep.mubr.f32.mxu0 %v167
    %677 = vmatmul.mubr.f32.gmra.mxu0 %v166
    %v678 = vpop.f32.mrf.mxu0
    %v679 = vadd.f32 %v265, %v678
    %v680 = vpop.f32.mrf.mxu0
    %681 = vmatprep.mubr.f32.mxu0 %v169
    %682 = vmatmul.mubr.f32.gmra.mxu0 %v168
    %v683 = vpop.f32.mrf.mxu0
    %v684 = vadd.f32 %v265, %v683
    %v685 = vpop.f32.mrf.mxu0
    %686 = vmatprep.mubr.f32.mxu0 %v171
    %687 = vmatmul.mubr.f32.gmra.mxu0 %v170
    %v688 = vpop.f32.mrf.mxu0
    %v689 = vadd.f32 %v265, %v688
    %v690 = vpop.f32.mrf.mxu0
    %691 = vmatprep.mubr.f32.mxu0 %v173
    %692 = vmatmul.mubr.f32.gmra.mxu0 %v172
    %v693 = vpop.f32.mrf.mxu0
    %v694 = vadd.f32 %v265, %v693
    %v695 = vpop.f32.mrf.mxu0
    %696 = vmatprep.mubr.f32.mxu0 %v175
    %697 = vmatmul.mubr.f32.gmra.mxu0 %v174
    %v698 = vpop.f32.mrf.mxu0
    %v699 = vadd.f32 %v265, %v698
    %v700 = vpop.f32.mrf.mxu0
    %701 = vmatprep.mubr.f32.mxu0 %v177
    %702 = vmatmul.mubr.f32.gmra.mxu0 %v176
    %v703 = vpop.f32.mrf.mxu0
    %v704 = vadd.f32 %v265, %v703
    %v705 = vpop.f32.mrf.mxu0
    %706 = vmatprep.mubr.f32.mxu0 %v179
    %707 = vmatmul.mubr.f32.gmra.mxu0 %v178
    %v708 = vpop.f32.mrf.mxu0
    %v709 = vadd.f32 %v265, %v708
    %v710 = vpop.f32.mrf.mxu0
    %711 = vmatprep.mubr.f32.mxu0 %v181
    %712 = vmatmul.mubr.f32.gmra.mxu0 %v180
    %v713 = vpop.f32.mrf.mxu0
    %v714 = vadd.f32 %v265, %v713
    %v715 = vpop.f32.mrf.mxu0
    %716 = vmatprep.mubr.f32.mxu0 %v183
    %717 = vmatmul.mubr.f32.gmra.mxu0 %v182
    %v718 = vpop.f32.mrf.mxu0
    %v719 = vadd.f32 %v265, %v718
    %v720 = vpop.f32.mrf.mxu0
    %721 = vmatprep.mubr.f32.mxu0 %v185
    %722 = vmatmul.mubr.f32.gmra.mxu0 %v184
    %v723 = vpop.f32.mrf.mxu0
    %v724 = vadd.f32 %v265, %v723
    %v725 = vpop.f32.mrf.mxu0
    %726 = vmatprep.mubr.f32.mxu0 %v187
    %727 = vmatmul.mubr.f32.gmra.mxu0 %v186
    %v728 = vpop.f32.mrf.mxu0
    %v729 = vadd.f32 %v265, %v728
    %v730 = vpop.f32.mrf.mxu0
    %731 = vmatprep.mubr.f32.mxu0 %v189
    %732 = vmatmul.mubr.f32.gmra.mxu0 %v188
    %v733 = vpop.f32.mrf.mxu0
    %v734 = vadd.f32 %v265, %v733
    %v735 = vpop.f32.mrf.mxu0
    %736 = vmatprep.mubr.f32.mxu0 %v191
    %737 = vmatmul.mubr.f32.gmra.mxu0 %v190
    %v738 = vpop.f32.mrf.mxu0
    %v739 = vadd.f32 %v265, %v738
    %v740 = vpop.f32.mrf.mxu0
    %741 = vmatprep.mubr.f32.mxu0 %v193
    %742 = vmatmul.mubr.f32.gmra.mxu0 %v192
    %v743 = vpop.f32.mrf.mxu0
    %v744 = vadd.f32 %v265, %v743
    %v745 = vpop.f32.mrf.mxu0
    %746 = vmatprep.mubr.f32.mxu0 %v195
    %747 = vmatmul.mubr.f32.gmra.mxu0 %v194
    %v748 = vpop.f32.mrf.mxu0
    %v749 = vadd.f32 %v265, %v748
    %v750 = vpop.f32.mrf.mxu0
    %751 = vmatprep.mubr.f32.mxu0 %v197
    %752 = vmatmul.mubr.f32.gmra.mxu0 %v196
    %v753 = vpop.f32.mrf.mxu0
    %v754 = vadd.f32 %v265, %v753
    %v755 = vpop.f32.mrf.mxu0
    %756 = vmatprep.mubr.f32.mxu0 %v199
    %757 = vmatmul.mubr.f32.gmra.mxu0 %v198
    %v758 = vpop.f32.mrf.mxu0
    %v759 = vadd.f32 %v265, %v758
    %v760 = vpop.f32.mrf.mxu0
    %761 = vmatprep.mubr.f32.mxu0 %v201
    %762 = vmatmul.mubr.f32.gmra.mxu0 %v200
    %v763 = vpop.f32.mrf.mxu0
    %v764 = vadd.f32 %v265, %v763
    %v765 = vpop.f32.mrf.mxu0
    %766 = vmatprep.mubr.f32.mxu0 %v203
    %767 = vmatmul.mubr.f32.gmra.mxu0 %v202
    %v768 = vpop.f32.mrf.mxu0
    %v769 = vadd.f32 %v265, %v768
    %v770 = vpop.f32.mrf.mxu0
    %771 = vmatprep.mubr.f32.mxu0 %v205
    %772 = vmatmul.mubr.f32.gmra.mxu0 %v204
    %v773 = vpop.f32.mrf.mxu0
    %v774 = vadd.f32 %v265, %v773
    %v775 = vpop.f32.mrf.mxu0
    %776 = vmatprep.mubr.f32.mxu0 %v207
    %777 = vmatmul.mubr.f32.gmra.mxu0 %v206
    %v778 = vpop.f32.mrf.mxu0
    %v779 = vadd.f32 %v265, %v778
    %v780 = vpop.f32.mrf.mxu0
    %781 = vmatprep.mubr.f32.mxu0 %v209
    %782 = vmatmul.mubr.f32.gmra.mxu0 %v208
    %v783 = vpop.f32.mrf.mxu0
    %v784 = vadd.f32 %v265, %v783
    %v785 = vpop.f32.mrf.mxu0
    %786 = vmatprep.mubr.f32.mxu0 %v211
    %787 = vmatmul.mubr.f32.gmra.mxu0 %v210
    %v788 = vpop.f32.mrf.mxu0
    %v789 = vadd.f32 %v265, %v788
    %v790 = vpop.f32.mrf.mxu0
    %791 = vmatprep.mubr.f32.mxu0 %v213
    %792 = vmatmul.mubr.f32.gmra.mxu0 %v212
    %v793 = vpop.f32.mrf.mxu0
    %v794 = vadd.f32 %v265, %v793
    %v795 = vpop.f32.mrf.mxu0
    %796 = vmatprep.mubr.f32.mxu0 %v215
    %797 = vmatmul.mubr.f32.gmra.mxu0 %v214
    %v798 = vpop.f32.mrf.mxu0
    %v799 = vadd.f32 %v265, %v798
    %v800 = vpop.f32.mrf.mxu0
    %801 = vmatprep.mubr.f32.mxu0 %v217
    %802 = vmatmul.mubr.f32.gmra.mxu0 %v216
    %v803 = vpop.f32.mrf.mxu0
    %v804 = vadd.f32 %v265, %v803
    %v805 = vpop.f32.mrf.mxu0
    %806 = vmatprep.mubr.f32.mxu0 %v219
    %807 = vmatmul.mubr.f32.gmra.mxu0 %v218
    %v808 = vpop.f32.mrf.mxu0
    %v809 = vadd.f32 %v265, %v808
    %v810 = vpop.f32.mrf.mxu0
    %811 = vmatprep.mubr.f32.mxu0 %v221
    %812 = vmatmul.mubr.f32.gmra.mxu0 %v220
    %v813 = vpop.f32.mrf.mxu0
    %v814 = vadd.f32 %v265, %v813
    %v815 = vpop.f32.mrf.mxu0
    %816 = vmatprep.mubr.f32.mxu0 %v223
    %817 = vmatmul.mubr.f32.gmra.mxu0 %v222
    %v818 = vpop.f32.mrf.mxu0
    %v819 = vadd.f32 %v265, %v818
    %v820 = vpop.f32.mrf.mxu0
    %821 = vmatprep.mubr.f32.mxu0 %v225
    %822 = vmatmul.mubr.f32.gmra.mxu0 %v224
    %v823 = vpop.f32.mrf.mxu0
    %v824 = vadd.f32 %v265, %v823
    %v825 = vpop.f32.mrf.mxu0
    %826 = vmatprep.mubr.f32.mxu0 %v227
    %827 = vmatmul.mubr.f32.gmra.mxu0 %v226
    %v828 = vpop.f32.mrf.mxu0
    %v829 = vadd.f32 %v265, %v828
    %v830 = vpop.f32.mrf.mxu0
    %831 = vdwg.mxu0
    %v832 = vmax.f32 %v334, 0.0
    %v833 = vmax.f32 %v339, 0.0
    %v834 = vmax.f32 %v344, 0.0
    %v835 = vmax.f32 %v349, 0.0
    %v836 = vmax.f32 %v354, 0.0
    %v837 = vmax.f32 %v359, 0.0
    %v838 = vmax.f32 %v364, 0.0
    %v839 = vmax.f32 %v369, 0.0
    %v840 = vmax.f32 %v374, 0.0
    %v841 = vmax.f32 %v379, 0.0
    %v842 = vmax.f32 %v384, 0.0
    %v843 = vmax.f32 %v389, 0.0
    %v844 = vmax.f32 %v394, 0.0
    %v845 = vmax.f32 %v399, 0.0
    %v846 = vmax.f32 %v404, 0.0
    %v847 = vmax.f32 %v409, 0.0
    %v848 = vmax.f32 %v414, 0.0
    %v849 = vmax.f32 %v419, 0.0
    %v850 = vmax.f32 %v424, 0.0
    %v851 = vmax.f32 %v429, 0.0
    %v852 = vmax.f32 %v434, 0.0
    %v853 = vmax.f32 %v439, 0.0
    %v854 = vmax.f32 %v444, 0.0
    %v855 = vmax.f32 %v449, 0.0
    %v856 = vmax.f32 %v454, 0.0
    %v857 = vmax.f32 %v459, 0.0
    %v858 = vmax.f32 %v464, 0.0
    %v859 = vmax.f32 %v469, 0.0
    %v860 = vmax.f32 %v474, 0.0
    %v861 = vmax.f32 %v479, 0.0
    %v862 = vmax.f32 %v484, 0.0
    %v863 = vmax.f32 %v489, 0.0
    %v864 = vmax.f32 %v494, 0.0
    %v865 = vmax.f32 %v499, 0.0
    %v866 = vmax.f32 %v504, 0.0
    %v867 = vmax.f32 %v509, 0.0
    %v868 = vmax.f32 %v514, 0.0
    %v869 = vmax.f32 %v519, 0.0
    %v870 = vmax.f32 %v524, 0.0
    %v871 = vmax.f32 %v529, 0.0
    %v872 = vmax.f32 %v534, 0.0
    %v873 = vmax.f32 %v539, 0.0
    %v874 = vmax.f32 %v544, 0.0
    %v875 = vmax.f32 %v549, 0.0
    %v876 = vmax.f32 %v554, 0.0
    %v877 = vmax.f32 %v559, 0.0
    %v878 = vmax.f32 %v564, 0.0
    %v879 = vmax.f32 %v569, 0.0
    %v880 = vmax.f32 %v574, 0.0
    %v881 = vmax.f32 %v579, 0.0
    %v882 = vmax.f32 %v584, 0.0
    %v883 = vmax.f32 %v589, 0.0
    %v884 = vmax.f32 %v594, 0.0
    %v885 = vmax.f32 %v599, 0.0
    %v886 = vmax.f32 %v604, 0.0
    %v887 = vmax.f32 %v609, 0.0
    %v888 = vmax.f32 %v614, 0.0
    %v889 = vmax.f32 %v619, 0.0
    %v890 = vmax.f32 %v624, 0.0
    %v891 = vmax.f32 %v629, 0.0
    %v892 = vmax.f32 %v634, 0.0
    %v893 = vmax.f32 %v639, 0.0
    %v894 = vmax.f32 %v644, 0.0
    %v895 = vmax.f32 %v649, 0.0
    %v896 = vmax.f32 %v654, 0.0
    %v897 = vmax.f32 %v659, 0.0
    %v898 = vmax.f32 %v664, 0.0
    %v899 = vmax.f32 %v669, 0.0
    %v900 = vmax.f32 %v674, 0.0
    %v901 = vmax.f32 %v679, 0.0
    %v902 = vmax.f32 %v684, 0.0
    %v903 = vmax.f32 %v689, 0.0
    %v904 = vmax.f32 %v694, 0.0
    %v905 = vmax.f32 %v699, 0.0
    %v906 = vmax.f32 %v704, 0.0
    %v907 = vmax.f32 %v709, 0.0
    %v908 = vmax.f32 %v714, 0.0
    %v909 = vmax.f32 %v719, 0.0
    %v910 = vmax.f32 %v724, 0.0
    %v911 = vmax.f32 %v729, 0.0
    %v912 = vmax.f32 %v734, 0.0
    %v913 = vmax.f32 %v739, 0.0
    %v914 = vmax.f32 %v744, 0.0
    %v915 = vmax.f32 %v749, 0.0
    %v916 = vmax.f32 %v754, 0.0
    %v917 = vmax.f32 %v759, 0.0
    %v918 = vmax.f32 %v764, 0.0
    %v919 = vmax.f32 %v769, 0.0
    %v920 = vmax.f32 %v774, 0.0
    %v921 = vmax.f32 %v779, 0.0
    %v922 = vmax.f32 %v784, 0.0
    %v923 = vmax.f32 %v789, 0.0
    %v924 = vmax.f32 %v794, 0.0
    %v925 = vmax.f32 %v799, 0.0
    %v926 = vmax.f32 %v804, 0.0
    %v927 = vmax.f32 %v809, 0.0
    %v928 = vmax.f32 %v814, 0.0
    %v929 = vmax.f32 %v819, 0.0
    %v930 = vmax.f32 %v824, 0.0
    %v931 = vmax.f32 %v829, 0.0
    %vm932 = vcmask 261120
    %933 = vst.msk [vmem:[%s3] sm:$0xff] %vm932, %v832
    %934 = vst.msk [vmem:[%s3 + $0x8] sm:$0xff] %vm932, %v833
    %935 = vst.msk [vmem:[%s3 + $0x10] sm:$0xff] %vm932, %v834
    %936 = vst.msk [vmem:[%s3 + $0x18] sm:$0xff] %vm932, %v835
    %937 = vst.msk [vmem:[%s3 + $0x20] sm:$0xff] %vm932, %v836
    %938 = vst.msk [vmem:[%s3 + $0x28] sm:$0xff] %vm932, %v837
    %939 = vst.msk [vmem:[%s3 + $0x30] sm:$0xff] %vm932, %v838
    %940 = vst.msk [vmem:[%s3 + $0x38] sm:$0xff] %vm932, %v839
    %941 = vst.msk [vmem:[%s3 + $0x40] sm:$0xff] %vm932, %v840
    %942 = vst.msk [vmem:[%s3 + $0x48] sm:$0xff] %vm932, %v841
    %943 = vst.msk [vmem:[%s3 + $0x50] sm:$0xff] %vm932, %v842
    %944 = vst.msk [vmem:[%s3 + $0x58] sm:$0xff] %vm932, %v843
    %945 = vst.msk [vmem:[%s3 + $0x60] sm:$0xff] %vm932, %v844
    %946 = vst.msk [vmem:[%s3 + $0x68] sm:$0xff] %vm932, %v845
    %947 = vst.msk [vmem:[%s3 + $0x70] sm:$0xff] %vm932, %v846
    %948 = vst.msk [vmem:[%s3 + $0x78] sm:$0xff] %vm932, %v847
    %949 = vst.msk [vmem:[%s3 + $0x80] sm:$0xff] %vm932, %v848
    %950 = vst.msk [vmem:[%s3 + $0x88] sm:$0xff] %vm932, %v849
    %951 = vst.msk [vmem:[%s3 + $0x90] sm:$0xff] %vm932, %v850
    %952 = vst.msk [vmem:[%s3 + $0x98] sm:$0xff] %vm932, %v851
    %953 = vst.msk [vmem:[%s3 + $0xa0] sm:$0xff] %vm932, %v852
    %954 = vst.msk [vmem:[%s3 + $0xa8] sm:$0xff] %vm932, %v853
    %955 = vst.msk [vmem:[%s3 + $0xb0] sm:$0xff] %vm932, %v854
    %956 = vst.msk [vmem:[%s3 + $0xb8] sm:$0xff] %vm932, %v855
    %957 = vst.msk [vmem:[%s3 + $0xc0] sm:$0xff] %vm932, %v856
    %958 = vst.msk [vmem:[%s3 + $0xc8] sm:$0xff] %vm932, %v857
    %959 = vst.msk [vmem:[%s3 + $0xd0] sm:$0xff] %vm932, %v858
    %960 = vst.msk [vmem:[%s3 + $0xd8] sm:$0xff] %vm932, %v859
    %961 = vst.msk [vmem:[%s3 + $0xe0] sm:$0xff] %vm932, %v860
    %962 = vst.msk [vmem:[%s3 + $0xe8] sm:$0xff] %vm932, %v861
    %963 = vst.msk [vmem:[%s3 + $0xf0] sm:$0xff] %vm932, %v862
    %964 = vst.msk [vmem:[%s3 + $0xf8] sm:$0xff] %vm932, %v863
    %965 = vst.msk [vmem:[%s3 + $0x100] sm:$0xff] %vm932, %v864
    %966 = vst.msk [vmem:[%s3 + $0x108] sm:$0xff] %vm932, %v865
    %967 = vst.msk [vmem:[%s3 + $0x110] sm:$0xff] %vm932, %v866
    %968 = vst.msk [vmem:[%s3 + $0x118] sm:$0xff] %vm932, %v867
    %969 = vst.msk [vmem:[%s3 + $0x120] sm:$0xff] %vm932, %v868
    %970 = vst.msk [vmem:[%s3 + $0x128] sm:$0xff] %vm932, %v869
    %971 = vst.msk [vmem:[%s3 + $0x130] sm:$0xff] %vm932, %v870
    %972 = vst.msk [vmem:[%s3 + $0x138] sm:$0xff] %vm932, %v871
    %973 = vst.msk [vmem:[%s3 + $0x140] sm:$0xff] %vm932, %v872
    %974 = vst.msk [vmem:[%s3 + $0x148] sm:$0xff] %vm932, %v873
    %975 = vst.msk [vmem:[%s3 + $0x150] sm:$0xff] %vm932, %v874
    %976 = vst.msk [vmem:[%s3 + $0x158] sm:$0xff] %vm932, %v875
    %977 = vst.msk [vmem:[%s3 + $0x160] sm:$0xff] %vm932, %v876
    %978 = vst.msk [vmem:[%s3 + $0x168] sm:$0xff] %vm932, %v877
    %979 = vst.msk [vmem:[%s3 + $0x170] sm:$0xff] %vm932, %v878
    %980 = vst.msk [vmem:[%s3 + $0x178] sm:$0xff] %vm932, %v879
    %981 = vst.msk [vmem:[%s3 + $0x180] sm:$0xff] %vm932, %v880
    %982 = vst.msk [vmem:[%s3 + $0x188] sm:$0xff] %vm932, %v881
    %983 = vst.msk [vmem:[%s3 + $0x190] sm:$0xff] %vm932, %v882
    %984 = vst.msk [vmem:[%s3 + $0x198] sm:$0xff] %vm932, %v883
    %985 = vst.msk [vmem:[%s3 + $0x1a0] sm:$0xff] %vm932, %v884
    %986 = vst.msk [vmem:[%s3 + $0x1a8] sm:$0xff] %vm932, %v885
    %987 = vst.msk [vmem:[%s3 + $0x1b0] sm:$0xff] %vm932, %v886
    %988 = vst.msk [vmem:[%s3 + $0x1b8] sm:$0xff] %vm932, %v887
    %989 = vst.msk [vmem:[%s3 + $0x1c0] sm:$0xff] %vm932, %v888
    %990 = vst.msk [vmem:[%s3 + $0x1c8] sm:$0xff] %vm932, %v889
    %991 = vst.msk [vmem:[%s3 + $0x1d0] sm:$0xff] %vm932, %v890
    %992 = vst.msk [vmem:[%s3 + $0x1d8] sm:$0xff] %vm932, %v891
    %993 = vst.msk [vmem:[%s3 + $0x1e0] sm:$0xff] %vm932, %v892
    %994 = vst.msk [vmem:[%s3 + $0x1e8] sm:$0xff] %vm932, %v893
    %995 = vst.msk [vmem:[%s3 + $0x1f0] sm:$0xff] %vm932, %v894
    %996 = vst.msk [vmem:[%s3 + $0x1f8] sm:$0xff] %vm932, %v895
    %997 = vst.msk [vmem:[%s3 + $0x200] sm:$0xff] %vm932, %v896
    %998 = vst.msk [vmem:[%s3 + $0x208] sm:$0xff] %vm932, %v897
    %999 = vst.msk [vmem:[%s3 + $0x210] sm:$0xff] %vm932, %v898
    %1000 = vst.msk [vmem:[%s3 + $0x218] sm:$0xff] %vm932, %v899
    %1001 = vst.msk [vmem:[%s3 + $0x220] sm:$0xff] %vm932, %v900
    %1002 = vst.msk [vmem:[%s3 + $0x228] sm:$0xff] %vm932, %v901
    %1003 = vst.msk [vmem:[%s3 + $0x230] sm:$0xff] %vm932, %v902
    %1004 = vst.msk [vmem:[%s3 + $0x238] sm:$0xff] %vm932, %v903
    %1005 = vst.msk [vmem:[%s3 + $0x240] sm:$0xff] %vm932, %v904
    %1006 = vst.msk [vmem:[%s3 + $0x248] sm:$0xff] %vm932, %v905
    %1007 = vst.msk [vmem:[%s3 + $0x250] sm:$0xff] %vm932, %v906
    %1008 = vst.msk [vmem:[%s3 + $0x258] sm:$0xff] %vm932, %v907
    %1009 = vst.msk [vmem:[%s3 + $0x260] sm:$0xff] %vm932, %v908
    %1010 = vst.msk [vmem:[%s3 + $0x268] sm:$0xff] %vm932, %v909
    %1011 = vst.msk [vmem:[%s3 + $0x270] sm:$0xff] %vm932, %v910
    %1012 = vst.msk [vmem:[%s3 + $0x278] sm:$0xff] %vm932, %v911
    %1013 = vst.msk [vmem:[%s3 + $0x280] sm:$0xff] %vm932, %v912
    %1014 = vst.msk [vmem:[%s3 + $0x288] sm:$0xff] %vm932, %v913
    %1015 = vst.msk [vmem:[%s3 + $0x290] sm:$0xff] %vm932, %v914
    %1016 = vst.msk [vmem:[%s3 + $0x298] sm:$0xff] %vm932, %v915
    %1017 = vst.msk [vmem:[%s3 + $0x2a0] sm:$0xff] %vm932, %v916
    %1018 = vst.msk [vmem:[%s3 + $0x2a8] sm:$0xff] %vm932, %v917
    %1019 = vst.msk [vmem:[%s3 + $0x2b0] sm:$0xff] %vm932, %v918
    %1020 = vst.msk [vmem:[%s3 + $0x2b8] sm:$0xff] %vm932, %v919
    %1021 = vst.msk [vmem:[%s3 + $0x2c0] sm:$0xff] %vm932, %v920
    %1022 = vst.msk [vmem:[%s3 + $0x2c8] sm:$0xff] %vm932, %v921
    %1023 = vst.msk [vmem:[%s3 + $0x2d0] sm:$0xff] %vm932, %v922
    %1024 = vst.msk [vmem:[%s3 + $0x2d8] sm:$0xff] %vm932, %v923
    %1025 = vst.msk [vmem:[%s3 + $0x2e0] sm:$0xff] %vm932, %v924
    %1026 = vst.msk [vmem:[%s3 + $0x2e8] sm:$0xff] %vm932, %v925
    %1027 = vst.msk [vmem:[%s3 + $0x2f0] sm:$0xff] %vm932, %v926
    %1028 = vst.msk [vmem:[%s3 + $0x2f8] sm:$0xff] %vm932, %v927
    %1029 = vst.msk [vmem:[%s3 + $0x300] sm:$0xff] %vm932, %v928
    %1030 = vst.msk [vmem:[%s3 + $0x308] sm:$0xff] %vm932, %v929
    %1031 = vst.msk [vmem:[%s3 + $0x310] sm:$0xff] %vm932, %v930
    %1032 = vst.msk [vmem:[%s3 + $0x318] sm:$0xff] %vm932, %v931
    // Predicated region
    $region18: #{tpu_custom_call.1} parent=1 // pred_check
      _
    $region19: #{tpu_custom_call.1} parent=1 // pred_check_branch
      %1034 = sbr.rel (0) target = $region21
    $region20: #{tpu_custom_call.1} parent=1 // pred_region
      _
    $region21: #{tpu_custom_call.1} parent=1 // pred_fallthru
      _
    // Predicated region
    $region22: #{tpu_custom_call.1} parent=1 // pred_check
      _
    $region23: #{tpu_custom_call.1} parent=1 // pred_check_branch
      %1036 = sbr.rel (0) target = $region25
    $region24: #{tpu_custom_call.1} parent=1 // pred_region
      _
    $region25: #{tpu_custom_call.1} parent=1 // pred_fallthru
      _
    %1037 = vsyncpa [#allocation3], 1

</llo_original>
